<compile_context>
chip_gen: v5e
topology: v5e:2x2
jax: 0.10.0
libtpu: 0.0.40
codegen_flags: <defaults>
</compile_context>

<pallas_src>
import jax
import jax.numpy as jnp
from jax.experimental import pallas as pl
from jax.experimental.pallas import tpu as pltpu

IN_FEATURES = 50
OUT_FEATURES = 1250
MAX_BATCH_TILE = 1024   # multiple of 8; out tile at tb=1024 is ~5 MiB ->
                        # ~11 MiB double-buffered footprint, fits every gen.


def _round_up(x, m):
    return ((x + m - 1) // m) * m


def linear_sigmoid_kernel(x_ref, w_ref, b_ref, o_ref):
    # x_ref: (tb, 50) f32, w_ref: (50, 1250) bf16, b_ref: (1, 1250) f32,
    # o_ref: (tb, 1250) f32.
    x = x_ref[...].astype(jnp.bfloat16)           # narrow MXU operand only
    z = jnp.dot(x, w_ref[...], preferred_element_type=jnp.float32)
    z = z + b_ref[...]                            # f32 bias add (VALU)
    # sigmoid(z) == 0.5 * tanh(z/2) + 0.5 : tanh runs on the EUP slot,
    # leaving only a mul+add on the VALU (no divide / reciprocal sequence).
    o_ref[...] = (0.5 * jnp.tanh(0.5 * z) + 0.5).astype(o_ref.dtype)


def prepare_params(w, b):
    """One-time param prep (hoisted out of the forward pass).

    w: [50, 1250] f32 (torch weight transposed), b: [1250] f32.
    Returns (w_bf16 [50,1250], b_f32 [1,1250]).
    """
    return w.astype(jnp.bfloat16), b.reshape(1, OUT_FEATURES).astype(jnp.float32)


def _choose_batch_tile(B):
    """Balanced batch tile, multiple of 8, >=2 tiles when B >= 16 (v7x TCs)."""
    if B <= 8:
        return max(8, _round_up(B, 8))
    n_tiles = max(2 if B >= 16 else 1, pl.cdiv(B, MAX_BATCH_TILE))
    return min(MAX_BATCH_TILE, _round_up(pl.cdiv(B, n_tiles), 8))


def simple1nn_forward(x, w_bf16, b_row):
    """x: [B, 50] f32, w_bf16: [50, 1250] bf16, b_row: [1, 1250] f32."""
    B = x.shape[0]
    tb = _choose_batch_tile(B)
    b_padded = _round_up(B, tb)
    x_p = jnp.pad(x, ((0, b_padded - B), (0, 0))) if b_padded != B else x

    out = pl.pallas_call(
        linear_sigmoid_kernel,
        out_shape=jax.ShapeDtypeStruct((b_padded, OUT_FEATURES), jnp.float32),
        grid=(b_padded // tb,),
        in_specs=[
            # x: tiled along batch; last dim (50) equals the full extent.
            pl.BlockSpec((tb, IN_FEATURES), lambda i: (i, 0)),
            # W and b: constant index_map -> resident in VMEM across tiles.
            pl.BlockSpec((IN_FEATURES, OUT_FEATURES), lambda i: (0, 0)),
            pl.BlockSpec((1, OUT_FEATURES), lambda i: (0, 0)),
        ],
        # Last dim 1250 == full array extent -> legal block; only the final
        # 98-lane vreg column uses a masked store.
        out_specs=pl.BlockSpec((tb, OUT_FEATURES), lambda i: (i, 0)),
        compiler_params=pltpu.CompilerParams(
            # Batch tiles are independent -> shard across TCs on v7x.
            dimension_semantics=("parallel",)
        ),
    )(x_p, w_bf16, b_row)

    return out if b_padded == B else out[:B]


def init_params(key):
    # Mimic torch.nn.Linear default init: U(-1/sqrt(fan_in), 1/sqrt(fan_in)).
    kw, kb = jax.random.split(key)
    bound = 1.0 / jnp.sqrt(jnp.float32(IN_FEATURES))
    w = jax.random.uniform(
        kw, (IN_FEATURES, OUT_FEATURES), jnp.float32, -bound, bound
    )
    b = jax.random.uniform(kb, (OUT_FEATURES,), jnp.float32, -bound, bound)
    return w, b


if __name__ == "__main__":
    key = jax.random.PRNGKey(0)
    kx, kx2, kp = jax.random.split(key, 3)

    w, b = init_params(kp)
    w_k, b_k = prepare_params(w, b)   # one-time prep, not in the forward pass

    # Small batch (single tile, no padding, no post-kernel slice).
    batch = 8
    x = jax.random.normal(kx, (batch, IN_FEATURES), jnp.float32)
    out = jax.block_until_ready(simple1nn_forward(x, w_k, b_k))
    ref = jax.nn.sigmoid(x @ w + b[None, :])
    assert out.shape == (batch, OUT_FEATURES)
    # bf16 MXU operands -> pre-activation error O(1e-3); sigmoid slope <= 0.25.
    assert jnp.allclose(out, ref, atol=5e-3, rtol=0)

    # Non-multiple-of-8 batch exercises padding + >=2-tile (megacore) path.
    batch2 = 200
    x2 = jax.random.normal(kx2, (batch2, IN_FEATURES), jnp.float32)
    out2 = jax.block_until_ready(simple1nn_forward(x2, w_k, b_k))
    ref2 = jax.nn.sigmoid(x2 @ w + b[None, :])
    assert out2.shape == (batch2, OUT_FEATURES)
    assert jnp.allclose(out2, ref2, atol=5e-3, rtol=0)

    print("KERNEL_OK")
</pallas_src>

<mosaic_0001>
module attributes {stable_mosaic.version = 11 : i64} {
  func.func @linear_sigmoid_kernel(%arg0: i32, %arg1: memref<8x50xf32, #tpu.memory_space<vmem>>, %arg2: memref<50x1250xbf16, #tpu.memory_space<vmem>>, %arg3: memref<1x1250xf32, #tpu.memory_space<vmem>>, %arg4: memref<8x1250xf32, #tpu.memory_space<vmem>>) attributes {dimension_semantics = [#tpu.dimension_semantics<parallel>], iteration_bounds = array<i64: 1>, scalar_prefetch = 0 : i64, scratch_operands = 0 : i64, tpu.core_type = #tpu.core_type<tc>, window_params = [{transform_indices = @transform_0, window_bounds = array<i64: 8, 50>}, {pipeline_mode = #tpu.pipeline_mode<synchronous>, transform_indices = @transform_1, window_bounds = array<i64: 50, 1250>}, {pipeline_mode = #tpu.pipeline_mode<synchronous>, transform_indices = @transform_2, window_bounds = array<i64: 1, 1250>}, {transform_indices = @transform_3, window_bounds = array<i64: 8, 1250>}]} {
    %c0 = arith.constant 0 : index
    %c0_0 = arith.constant 0 : index
    %0 = vector.load %arg1[%c0, %c0_0] : memref<8x50xf32, #tpu.memory_space<vmem>>, vector<8x50xf32>
    %1 = arith.truncf %0 : vector<8x50xf32> to vector<8x50xbf16>
    %c0_1 = arith.constant 0 : index
    %c0_2 = arith.constant 0 : index
    %2 = vector.load %arg2[%c0_1, %c0_2] : memref<50x1250xbf16, #tpu.memory_space<vmem>>, vector<50x1250xbf16>
    %cst = arith.constant dense<0.000000e+00> : vector<8x1250xf32>
    %3 = tpu.matmul %1, %2, %cst {dimension_numbers = #tpu.dot_dimension_numbers<[1], [0], [0], [1], [0, 0, 1, 1], [], []>} : vector<8x50xbf16>, vector<50x1250xbf16>, vector<8x1250xf32> -> vector<8x1250xf32>
    %c0_3 = arith.constant 0 : index
    %c0_4 = arith.constant 0 : index
    %4 = vector.load %arg3[%c0_3, %c0_4] : memref<1x1250xf32, #tpu.memory_space<vmem>>, vector<1x1250xf32>
    %5 = vector.broadcast %4 : vector<1x1250xf32> to vector<8x1250xf32>
    %6 = arith.addf %3, %5 : vector<8x1250xf32>
    %cst_5 = arith.constant 5.000000e-01 : f32
    %7 = vector.broadcast %cst_5 : f32 to vector<8x1250xf32>
    %8 = arith.mulf %7, %6 : vector<8x1250xf32>
    %9 = math.tanh %8 : vector<8x1250xf32>
    %cst_6 = arith.constant 5.000000e-01 : f32
    %10 = vector.broadcast %cst_6 : f32 to vector<8x1250xf32>
    %11 = arith.mulf %10, %9 : vector<8x1250xf32>
    %cst_7 = arith.constant 5.000000e-01 : f32
    %12 = vector.broadcast %cst_7 : f32 to vector<8x1250xf32>
    %13 = arith.addf %11, %12 : vector<8x1250xf32>
    %c0_8 = arith.constant 0 : index
    %c0_9 = arith.constant 0 : index
    %14 = vector.load %arg4[%c0_8, %c0_9] : memref<8x1250xf32, #tpu.memory_space<vmem>>, vector<8x1250xf32>
    tpu.vector_store %arg4[%c0_8, %c0_9], %13 {strides = array<i32>} : memref<8x1250xf32, #tpu.memory_space<vmem>>, vector<8x1250xf32>,
    return
  }
  func.func @transform_0(%arg0: i32) -> (i32, i32) {
    %c0_i32 = arith.constant 0 : i32
    %c0_i32_0 = arith.constant 0 : i32
    return %arg0, %c0_i32 : i32, i32
  }
  func.func @transform_1(%arg0: i32) -> (i32, i32) {
    %c0_i32 = arith.constant 0 : i32
    %c0_i32_0 = arith.constant 0 : i32
    %c0_i32_1 = arith.constant 0 : i32
    return %c0_i32, %c0_i32_0 : i32, i32
  }
  func.func @transform_2(%arg0: i32) -> (i32, i32) {
    %c0_i32 = arith.constant 0 : i32
    %c0_i32_0 = arith.constant 0 : i32
    %c0_i32_1 = arith.constant 0 : i32
    return %c0_i32, %c0_i32_0 : i32, i32
  }
  func.func @transform_3(%arg0: i32) -> (i32, i32) {
    %c0_i32 = arith.constant 0 : i32
    %c0_i32_0 = arith.constant 0 : i32
    return %arg0, %c0_i32 : i32, i32
  }
}

</mosaic_0001>

<llo_original>
// kernel: tpu_custom_call.1
$region0: #{tpu_custom_call.1}
  #allocation0 [shape = 'u32[]', space=smem, size = 0x4, offset = 0x4, fixed_abs, tag = 'smem constant byte address 0x4 - core index']
  #allocation1 [shape = 'u32[72,128]{1,0:T(1,128)}', space=vmem, size = 0x9000, scoped, tag = 'internal scratch']
  %s0 = inlined_call_operand.hbm [shape: f32[8,50], index: 0, kind: input, shape index: {}]
  %s1 = inlined_call_operand.hbm [shape: bf16[50,1250], index: 1, kind: input, shape index: {}]
  %s2 = inlined_call_operand.hbm [shape: f32[1,1250], index: 2, kind: input, shape index: {}]
  %s3 = inlined_call_operand.hbm [shape: f32[8,1250], index: 3, kind: output, shape index: {}]
  %s4 = sld [smem:[#allocation0]]
  $region34: #{tpu_custom_call.1} parent=0
    _
  %s6 = ssub.s32 1, %s4
  %s7 = scalar_select 0, %s6, %s4
  $region1: #{tpu_custom_call.1} parent=0
    #allocation2 [shape = 'u8[4096]{0}', space=vmem, size = 0x1000, scoped, tag = 'input window, operand 0, single buffered']
    #allocation3 [shape = 's32[1]{0}', space=sflag, size = 0x4, scoped, tag = 'scoped memory for tpu_custom_call.1']
    #allocation4 [shape = 's32[1]{0}', space=sflag, size = 0x4, scoped, tag = 'scoped memory for tpu_custom_call.1']
    #allocation5 [shape = 'u8[143360]{0}', space=vmem, size = 0x23000, scoped, tag = 'input window, operand 1, single buffered']
    #allocation6 [shape = 's32[1]{0}', space=sflag, size = 0x4, scoped, tag = 'scoped memory for tpu_custom_call.1']
    #allocation7 [shape = 'u8[5120]{0}', space=vmem, size = 0x1400, scoped, tag = 'input window, operand 2, single buffered']
    #allocation8 [shape = 'u8[40960]{0}', space=vmem, size = 0xa000, scoped, tag = 'output window, operand 0, single buffered']
    %8 = vsyncpa [#allocation3], 0
    %9 = vsyncpa [#allocation6], 0
    %10 = vsyncpa [#allocation4], 0
    // Predicated region
    $region2: #{tpu_custom_call.1} parent=1 // pred_check
      _
    $region3: #{tpu_custom_call.1} parent=1 // pred_check_branch
      %12 = sbr.rel (0) target = $region5
    $region4: #{tpu_custom_call.1} parent=1 // pred_region
      %14 = vsyncadd [#allocation3], 0
      %s16 = sshll.u32 %s0, 4
      %s17 = int_to_ptr.hbm [resolvable:$true] %s16
      %s18 = sshll.u32 [#allocation2], 4
      %s19 = int_to_ptr.vmem [resolvable:$true] %s18
      %21 = dma.hbm_to_vmem [thread:$0]  %s17, 128, %s19, [#allocation3]
    $region5: #{tpu_custom_call.1} parent=1 // pred_fallthru
      _
    // Predicated region
    $region6: #{tpu_custom_call.1} parent=1 // pred_check
      _
    $region7: #{tpu_custom_call.1} parent=1 // pred_check_branch
      %23 = sbr.rel (0) target = $region9
    $region8: #{tpu_custom_call.1} parent=1 // pred_region
      %25 = vsyncadd [#allocation6], 0
      %s26 = sshll.u32 %s1, 4
      %s27 = int_to_ptr.hbm [resolvable:$true] %s26
      %s28 = sshll.u32 [#allocation5], 4
      %s29 = int_to_ptr.vmem [resolvable:$true] %s28
      %34 = dma.hbm_to_vmem [thread:$0]  %s27, 4480, %s29, [#allocation6], 640, 640, 40
    $region9: #{tpu_custom_call.1} parent=1 // pred_fallthru
      _
    // Predicated region
    $region10: #{tpu_custom_call.1} parent=1 // pred_check
      _
    $region11: #{tpu_custom_call.1} parent=1 // pred_check_branch
      %36 = sbr.rel (0) target = $region13
    $region12: #{tpu_custom_call.1} parent=1 // pred_region
      %38 = vsyncadd [#allocation6], 0
      %s40 = sshll.u32 %s2, 4
      %s41 = int_to_ptr.hbm [resolvable:$true] %s40
      %s42 = sshll.u32 [#allocation7], 4
      %s43 = int_to_ptr.vmem [resolvable:$true] %s42
      %45 = dma.hbm_to_vmem [thread:$0]  %s41, 160, %s43, [#allocation6]
    $region13: #{tpu_custom_call.1} parent=1 // pred_fallthru
      _
    // Predicated region
    $region14: #{tpu_custom_call.1} parent=1 // pred_check
      _
    $region15: #{tpu_custom_call.1} parent=1 // pred_check_branch
      %47 = sbr.rel (0) target = $region17
    $region16: #{tpu_custom_call.1} parent=1 // pred_region
      %49 = dma.done [#allocation3], 128
    $region17: #{tpu_custom_call.1} parent=1 // pred_fallthru
      _
    // Predicated region
    $region18: #{tpu_custom_call.1} parent=1 // pred_check
      _
    $region19: #{tpu_custom_call.1} parent=1 // pred_check_branch
      %51 = sbr.rel (0) target = $region21
    $region20: #{tpu_custom_call.1} parent=1 // pred_region
      %53 = dma.done [#allocation6], 4480
    $region21: #{tpu_custom_call.1} parent=1 // pred_fallthru
      _
    // Predicated region
    $region22: #{tpu_custom_call.1} parent=1 // pred_check
      _
    $region23: #{tpu_custom_call.1} parent=1 // pred_check_branch
      %55 = sbr.rel (0) target = $region25
    $region24: #{tpu_custom_call.1} parent=1 // pred_region
      %57 = dma.done [#allocation6], 160
    $region25: #{tpu_custom_call.1} parent=1 // pred_fallthru
      _
    %v59 = vld [vmem:[#allocation2] sm:$0xff]
    %v60 = vpack.c.bf16 %v59, %v59
    %v61 = vld [vmem:[#allocation5] sm:$0xff]
    %v62 = vld [vmem:[#allocation5 + $0x8] sm:$0xff]
    %v63 = vld [vmem:[#allocation5 + $0x10] sm:$0xff]
    %v64 = vld [vmem:[#allocation5 + $0x18] sm:$0xff]
    %v65 = vld [vmem:[#allocation5 + $0x20] sm:$0xff]
    %v66 = vld [vmem:[#allocation5 + $0x28] sm:$0xff]
    %v67 = vld [vmem:[#allocation5 + $0x30] sm:$0xff]
    %v68 = vld [vmem:[#allocation5 + $0x38] sm:$0xff]
    %v69 = vld [vmem:[#allocation5 + $0x40] sm:$0xff]
    %v70 = vld [vmem:[#allocation5 + $0x48] sm:$0xff]
    %v71 = vld [vmem:[#allocation5 + $0x50] sm:$0xff]
    %v72 = vld [vmem:[#allocation5 + $0x58] sm:$0xff]
    %v73 = vld [vmem:[#allocation5 + $0x60] sm:$0xff]
    %v74 = vld [vmem:[#allocation5 + $0x68] sm:$0xff]
    %v75 = vld [vmem:[#allocation5 + $0x70] sm:$0xff]
    %v76 = vld [vmem:[#allocation5 + $0x78] sm:$0xff]
    %v77 = vld [vmem:[#allocation5 + $0x80] sm:$0xff]
    %v78 = vld [vmem:[#allocation5 + $0x88] sm:$0xff]
    %v79 = vld [vmem:[#allocation5 + $0x90] sm:$0xff]
    %v80 = vld [vmem:[#allocation5 + $0x98] sm:$0xff]
    %v81 = vld [vmem:[#allocation5 + $0xa0] sm:$0xff]
    %v82 = vld [vmem:[#allocation5 + $0xa8] sm:$0xff]
    %v83 = vld [vmem:[#allocation5 + $0xb0] sm:$0xff]
    %v84 = vld [vmem:[#allocation5 + $0xb8] sm:$0xff]
    %v85 = vld [vmem:[#allocation5 + $0xc0] sm:$0xff]
    %v86 = vld [vmem:[#allocation5 + $0xc8] sm:$0xff]
    %v87 = vld [vmem:[#allocation5 + $0xd0] sm:$0xff]
    %v88 = vld [vmem:[#allocation5 + $0xd8] sm:$0xff]
    %v89 = vld [vmem:[#allocation5 + $0xe0] sm:$0xff]
    %v90 = vld [vmem:[#allocation5 + $0xe8] sm:$0xff]
    %v91 = vld [vmem:[#allocation5 + $0xf0] sm:$0x11]
    %v92 = vld [vmem:[#allocation5 + $0xf8] sm:$0x11]
    %v93 = vld [vmem:[#allocation5 + $0x100] sm:$0x11]
    %v94 = vld [vmem:[#allocation5 + $0x108] sm:$0x11]
    %v95 = vld [vmem:[#allocation5 + $0x110] sm:$0x11]
    %v96 = vld [vmem:[#allocation7] sm:$0xff]
    %v97 = vld [vmem:[#allocation7 + $0x8] sm:$0x3]
    %v100 = vperm.slane %v96, 0
    %v101 = vperm.slane %v96, 1
    %v102 = vperm.slane %v96, 2
    %v103 = vperm.slane %v96, 3
    %v104 = vperm.slane %v96, 4
    %v105 = vperm.slane %v96, 5
    %v106 = vperm.slane %v96, 6
    %v107 = vperm.slane %v96, 7
    %v108 = vperm.slane %v97, 0
    %v109 = vperm.slane %v97, 1
    %v155 = vunpack.c.l.b16 %v61
    %v156 = vunpack.c.h.b16 %v61
    %v157 = vunpack.c.l.b16 %v62
    %v158 = vunpack.c.h.b16 %v62
    %v159 = vunpack.c.l.b16 %v63
    %v160 = vunpack.c.h.b16 %v63
    %v161 = vunpack.c.l.b16 %v64
    %v162 = vunpack.c.h.b16 %v64
    %v163 = vunpack.c.l.b16 %v65
    %v164 = vunpack.c.h.b16 %v65
    %v165 = vunpack.c.l.b16 %v66
    %v166 = vunpack.c.h.b16 %v66
    %v167 = vunpack.c.l.b16 %v67
    %v168 = vunpack.c.h.b16 %v67
    %v169 = vunpack.c.l.b16 %v68
    %v170 = vunpack.c.h.b16 %v68
    %v171 = vunpack.c.l.b16 %v69
    %v172 = vunpack.c.h.b16 %v69
    %v173 = vunpack.c.l.b16 %v70
    %v174 = vunpack.c.h.b16 %v70
    %v175 = vunpack.c.l.b16 %v71
    %v176 = vunpack.c.h.b16 %v71
    %v177 = vunpack.c.l.b16 %v72
    %v178 = vunpack.c.h.b16 %v72
    %v179 = vunpack.c.l.b16 %v73
    %v180 = vunpack.c.h.b16 %v73
    %v181 = vunpack.c.l.b16 %v74
    %v182 = vunpack.c.h.b16 %v74
    %v183 = vunpack.c.l.b16 %v75
    %v184 = vunpack.c.h.b16 %v75
    %v185 = vunpack.c.l.b16 %v76
    %v186 = vunpack.c.h.b16 %v76
    %v187 = vunpack.c.l.b16 %v77
    %v188 = vunpack.c.h.b16 %v77
    %v189 = vunpack.c.l.b16 %v78
    %v190 = vunpack.c.h.b16 %v78
    %v191 = vunpack.c.l.b16 %v79
    %v192 = vunpack.c.h.b16 %v79
    %v193 = vunpack.c.l.b16 %v80
    %v194 = vunpack.c.h.b16 %v80
    %v195 = vunpack.c.l.b16 %v81
    %v196 = vunpack.c.h.b16 %v81
    %v197 = vunpack.c.l.b16 %v82
    %v198 = vunpack.c.h.b16 %v82
    %v199 = vunpack.c.l.b16 %v83
    %v200 = vunpack.c.h.b16 %v83
    %v201 = vunpack.c.l.b16 %v84
    %v202 = vunpack.c.h.b16 %v84
    %v203 = vunpack.c.l.b16 %v85
    %v204 = vunpack.c.h.b16 %v85
    %v205 = vunpack.c.l.b16 %v86
    %v206 = vunpack.c.h.b16 %v86
    %v207 = vunpack.c.l.b16 %v87
    %v208 = vunpack.c.h.b16 %v87
    %v209 = vunpack.c.l.b16 %v88
    %v210 = vunpack.c.h.b16 %v88
    %v211 = vunpack.c.l.b16 %v89
    %v212 = vunpack.c.h.b16 %v89
    %v213 = vunpack.c.l.b16 %v90
    %v214 = vunpack.c.h.b16 %v90
    %v215 = vunpack.c.l.b16 %v91
    %v216 = vunpack.c.h.b16 %v91
    %v217 = vunpack.c.l.b16 %v92
    %v218 = vunpack.c.h.b16 %v92
    %v219 = vunpack.c.l.b16 %v93
    %v220 = vunpack.c.h.b16 %v93
    %v221 = vunpack.c.l.b16 %v94
    %v222 = vunpack.c.h.b16 %v94
    %v223 = vunpack.c.l.b16 %v95
    %v224 = vunpack.c.h.b16 %v95
    %v225 = vpack.c.b16 %v165, %v155
    %v226 = vpack.c.b16 %v166, %v156
    %v227 = vpack.c.b16 %v167, %v157
    %v228 = vpack.c.b16 %v168, %v158
    %v229 = vpack.c.b16 %v169, %v159
    %v230 = vpack.c.b16 %v170, %v160
    %v231 = vpack.c.b16 %v171, %v161
    %v232 = vpack.c.b16 %v172, %v162
    %v233 = vpack.c.b16 %v173, %v163
    %v234 = vpack.c.b16 %v174, %v164
    %v235 = vpack.c.b16 %v185, %v175
    %v236 = vpack.c.b16 %v186, %v176
    %v237 = vpack.c.b16 %v187, %v177
    %v238 = vpack.c.b16 %v188, %v178
    %v239 = vpack.c.b16 %v189, %v179
    %v240 = vpack.c.b16 %v190, %v180
    %v241 = vpack.c.b16 %v191, %v181
    %v242 = vpack.c.b16 %v192, %v182
    %v243 = vpack.c.b16 %v193, %v183
    %v244 = vpack.c.b16 %v194, %v184
    %v245 = vpack.c.b16 %v205, %v195
    %v246 = vpack.c.b16 %v206, %v196
    %v247 = vpack.c.b16 %v207, %v197
    %v248 = vpack.c.b16 %v208, %v198
    %v249 = vpack.c.b16 %v209, %v199
    %v250 = vpack.c.b16 %v210, %v200
    %v251 = vpack.c.b16 %v211, %v201
    %v252 = vpack.c.b16 %v212, %v202
    %v253 = vpack.c.b16 %v213, %v203
    %v254 = vpack.c.b16 %v214, %v204
    %v255 = vpack.c.b16 %v215, %v215
    %v256 = vpack.c.b16 %v216, %v216
    %v257 = vpack.c.b16 %v217, %v217
    %v258 = vpack.c.b16 %v218, %v218
    %v259 = vpack.c.b16 %v219, %v219
    %v260 = vpack.c.b16 %v220, %v220
    %v261 = vpack.c.b16 %v221, %v221
    %v262 = vpack.c.b16 %v222, %v222
    %v263 = vpack.c.b16 %v223, %v223
    %v264 = vpack.c.b16 %v224, %v224
    %vm295 = vcmask 408576
    %v297 = vsel %vm295, %v60, 0
    %vm299 = vcmask 1040384
    %v301 = vsel %vm299, %v255, 0
    %v304 = vsel %vm299, %v256, 0
    %v307 = vsel %vm299, %v257, 0
    %v310 = vsel %vm299, %v258, 0
    %v313 = vsel %vm299, %v259, 0
    %v316 = vsel %vm299, %v260, 0
    %v319 = vsel %vm299, %v261, 0
    %v322 = vsel %vm299, %v262, 0
    %v325 = vsel %vm299, %v263, 0
    %v328 = vsel %vm299, %v264, 0
    %330 = vmatpush.bf16.msra.mxu0 0
    %331 = vmatpush.bf16.msra.mxu0 0
    %332 = vmatpush.bf16.msra.mxu0 0
    %333 = vmatpush.bf16.msra.mxu0 0
    %334 = vmatpush.bf16.msra.mxu0 %v301
    %335 = vmatpush.bf16.msra.mxu0 %v245
    %336 = vmatpush.bf16.msra.mxu0 %v235
    %337 = vmatpush.bf16.msra.mxu0 %v225
    %338 = vmatmul.bf16.gmra.mxu0 %v297
    %v339 = vpop.f32.mrf.mxu0
    %v340 = vadd.f32 %v100, %v339
    %v341 = vpop.f32.mrf.mxu0
    %342 = vdwg.mxu0
    %343 = vmatpush.bf16.msra.mxu0 0
    %344 = vmatpush.bf16.msra.mxu0 0
    %345 = vmatpush.bf16.msra.mxu0 0
    %346 = vmatpush.bf16.msra.mxu0 0
    %347 = vmatpush.bf16.msra.mxu0 %v304
    %348 = vmatpush.bf16.msra.mxu0 %v246
    %349 = vmatpush.bf16.msra.mxu0 %v236
    %350 = vmatpush.bf16.msra.mxu0 %v226
    %351 = vmatmul.bf16.gmra.mxu0 %v297
    %v352 = vpop.f32.mrf.mxu0
    %v353 = vadd.f32 %v101, %v352
    %v354 = vpop.f32.mrf.mxu0
    %355 = vdwg.mxu0
    %356 = vmatpush.bf16.msra.mxu0 0
    %357 = vmatpush.bf16.msra.mxu0 0
    %358 = vmatpush.bf16.msra.mxu0 0
    %359 = vmatpush.bf16.msra.mxu0 0
    %360 = vmatpush.bf16.msra.mxu0 %v307
    %361 = vmatpush.bf16.msra.mxu0 %v247
    %362 = vmatpush.bf16.msra.mxu0 %v237
    %363 = vmatpush.bf16.msra.mxu0 %v227
    %364 = vmatmul.bf16.gmra.mxu0 %v297
    %v365 = vpop.f32.mrf.mxu0
    %v366 = vadd.f32 %v102, %v365
    %v367 = vpop.f32.mrf.mxu0
    %368 = vdwg.mxu0
    %369 = vmatpush.bf16.msra.mxu0 0
    %370 = vmatpush.bf16.msra.mxu0 0
    %371 = vmatpush.bf16.msra.mxu0 0
    %372 = vmatpush.bf16.msra.mxu0 0
    %373 = vmatpush.bf16.msra.mxu0 %v310
    %374 = vmatpush.bf16.msra.mxu0 %v248
    %375 = vmatpush.bf16.msra.mxu0 %v238
    %376 = vmatpush.bf16.msra.mxu0 %v228
    %377 = vmatmul.bf16.gmra.mxu0 %v297
    %v378 = vpop.f32.mrf.mxu0
    %v379 = vadd.f32 %v103, %v378
    %v380 = vpop.f32.mrf.mxu0
    %381 = vdwg.mxu0
    %382 = vmatpush.bf16.msra.mxu0 0
    %383 = vmatpush.bf16.msra.mxu0 0
    %384 = vmatpush.bf16.msra.mxu0 0
    %385 = vmatpush.bf16.msra.mxu0 0
    %386 = vmatpush.bf16.msra.mxu0 %v313
    %387 = vmatpush.bf16.msra.mxu0 %v249
    %388 = vmatpush.bf16.msra.mxu0 %v239
    %389 = vmatpush.bf16.msra.mxu0 %v229
    %390 = vmatmul.bf16.gmra.mxu0 %v297
    %v391 = vpop.f32.mrf.mxu0
    %v392 = vadd.f32 %v104, %v391
    %v393 = vpop.f32.mrf.mxu0
    %394 = vdwg.mxu0
    %395 = vmatpush.bf16.msra.mxu0 0
    %396 = vmatpush.bf16.msra.mxu0 0
    %397 = vmatpush.bf16.msra.mxu0 0
    %398 = vmatpush.bf16.msra.mxu0 0
    %399 = vmatpush.bf16.msra.mxu0 %v316
    %400 = vmatpush.bf16.msra.mxu0 %v250
    %401 = vmatpush.bf16.msra.mxu0 %v240
    %402 = vmatpush.bf16.msra.mxu0 %v230
    %403 = vmatmul.bf16.gmra.mxu0 %v297
    %v404 = vpop.f32.mrf.mxu0
    %v405 = vadd.f32 %v105, %v404
    %v406 = vpop.f32.mrf.mxu0
    %407 = vdwg.mxu0
    %408 = vmatpush.bf16.msra.mxu0 0
    %409 = vmatpush.bf16.msra.mxu0 0
    %410 = vmatpush.bf16.msra.mxu0 0
    %411 = vmatpush.bf16.msra.mxu0 0
    %412 = vmatpush.bf16.msra.mxu0 %v319
    %413 = vmatpush.bf16.msra.mxu0 %v251
    %414 = vmatpush.bf16.msra.mxu0 %v241
    %415 = vmatpush.bf16.msra.mxu0 %v231
    %416 = vmatmul.bf16.gmra.mxu0 %v297
    %v417 = vpop.f32.mrf.mxu0
    %v418 = vadd.f32 %v106, %v417
    %v419 = vpop.f32.mrf.mxu0
    %420 = vdwg.mxu0
    %421 = vmatpush.bf16.msra.mxu0 0
    %422 = vmatpush.bf16.msra.mxu0 0
    %423 = vmatpush.bf16.msra.mxu0 0
    %424 = vmatpush.bf16.msra.mxu0 0
    %425 = vmatpush.bf16.msra.mxu0 %v322
    %426 = vmatpush.bf16.msra.mxu0 %v252
    %427 = vmatpush.bf16.msra.mxu0 %v242
    %428 = vmatpush.bf16.msra.mxu0 %v232
    %429 = vmatmul.bf16.gmra.mxu0 %v297
    %v430 = vpop.f32.mrf.mxu0
    %v431 = vadd.f32 %v107, %v430
    %v432 = vpop.f32.mrf.mxu0
    %433 = vdwg.mxu0
    %434 = vmatpush.bf16.msra.mxu0 0
    %435 = vmatpush.bf16.msra.mxu0 0
    %436 = vmatpush.bf16.msra.mxu0 0
    %437 = vmatpush.bf16.msra.mxu0 0
    %438 = vmatpush.bf16.msra.mxu0 %v325
    %439 = vmatpush.bf16.msra.mxu0 %v253
    %440 = vmatpush.bf16.msra.mxu0 %v243
    %441 = vmatpush.bf16.msra.mxu0 %v233
    %442 = vmatmul.bf16.gmra.mxu0 %v297
    %v443 = vpop.f32.mrf.mxu0
    %v444 = vadd.f32 %v108, %v443
    %v445 = vpop.f32.mrf.mxu0
    %446 = vdwg.mxu0
    %447 = vmatpush.bf16.msra.mxu0 0
    %448 = vmatpush.bf16.msra.mxu0 0
    %449 = vmatpush.bf16.msra.mxu0 0
    %450 = vmatpush.bf16.msra.mxu0 0
    %451 = vmatpush.bf16.msra.mxu0 %v328
    %452 = vmatpush.bf16.msra.mxu0 %v254
    %453 = vmatpush.bf16.msra.mxu0 %v244
    %454 = vmatpush.bf16.msra.mxu0 %v234
    %455 = vmatmul.bf16.gmra.mxu0 %v297
    %v456 = vpop.f32.mrf.mxu0
    %v457 = vadd.f32 %v109, %v456
    %v458 = vpop.f32.mrf.mxu0
    %459 = vdwg.mxu0
    %v460 = vmul.f32 %v340, 0.5
    %v461 = vmul.f32 %v353, 0.5
    %v462 = vmul.f32 %v366, 0.5
    %v463 = vmul.f32 %v379, 0.5
    %v464 = vmul.f32 %v392, 0.5
    %v465 = vmul.f32 %v405, 0.5
    %v466 = vmul.f32 %v418, 0.5
    %v467 = vmul.f32 %v431, 0.5
    %v468 = vmul.f32 %v444, 0.5
    %v469 = vmul.f32 %v457, 0.5
    %v470 = vtanh.pop %v460
    %v471 = vtanh.pop %v461
    %v472 = vtanh.pop %v462
    %v473 = vtanh.pop %v463
    %v474 = vtanh.pop %v464
    %v475 = vtanh.pop %v465
    %v476 = vtanh.pop %v466
    %v477 = vtanh.pop %v467
    %v478 = vtanh.pop %v468
    %v479 = vtanh.pop %v469
    %v480 = vmul.f32 %v470, 0.5
    %v481 = vmul.f32 %v471, 0.5
    %v482 = vmul.f32 %v472, 0.5
    %v483 = vmul.f32 %v473, 0.5
    %v484 = vmul.f32 %v474, 0.5
    %v485 = vmul.f32 %v475, 0.5
    %v486 = vmul.f32 %v476, 0.5
    %v487 = vmul.f32 %v477, 0.5
    %v488 = vmul.f32 %v478, 0.5
    %v489 = vmul.f32 %v479, 0.5
    %v490 = vadd.f32 %v480, 0.5
    %v491 = vadd.f32 %v481, 0.5
    %v492 = vadd.f32 %v482, 0.5
    %v493 = vadd.f32 %v483, 0.5
    %v494 = vadd.f32 %v484, 0.5
    %v495 = vadd.f32 %v485, 0.5
    %v496 = vadd.f32 %v486, 0.5
    %v497 = vadd.f32 %v487, 0.5
    %v498 = vadd.f32 %v488, 0.5
    %v499 = vadd.f32 %v489, 0.5
    %500 = vst [vmem:[#allocation8] sm:$0xff] %v490
    %501 = vst [vmem:[#allocation8 + $0x8] sm:$0xff] %v491
    %502 = vst [vmem:[#allocation8 + $0x10] sm:$0xff] %v492
    %503 = vst [vmem:[#allocation8 + $0x18] sm:$0xff] %v493
    %504 = vst [vmem:[#allocation8 + $0x20] sm:$0xff] %v494
    %505 = vst [vmem:[#allocation8 + $0x28] sm:$0xff] %v495
    %506 = vst [vmem:[#allocation8 + $0x30] sm:$0xff] %v496
    %507 = vst [vmem:[#allocation8 + $0x38] sm:$0xff] %v497
    %508 = vst [vmem:[#allocation8 + $0x40] sm:$0xff] %v498
    %vm509 = vcmask 801792
    %510 = vst.msk [vmem:[#allocation8 + $0x48] sm:$0xff] %vm509, %v499
    // Predicated region
    $region26: #{tpu_custom_call.1} parent=1 // pred_check
      _
    $region27: #{tpu_custom_call.1} parent=1 // pred_check_branch
      %512 = sbr.rel (0) target = $region29
    $region28: #{tpu_custom_call.1} parent=1 // pred_region
      %514 = vsyncadd [#allocation4], 0
      %s516 = sshll.u32 [#allocation8], 4
      %s517 = int_to_ptr.vmem [resolvable:$true] %s516
      %s518 = sshll.u32 %s3, 4
      %s519 = int_to_ptr.hbm [resolvable:$true] %s518
      %521 = dma.vmem_to_hbm [thread:$0]  %s517, 1280, %s519, [#allocation4]
    $region29: #{tpu_custom_call.1} parent=1 // pred_fallthru
      _
    // Predicated region
    $region30: #{tpu_custom_call.1} parent=1 // pred_check
      _
    $region31: #{tpu_custom_call.1} parent=1 // pred_check_branch
      %523 = sbr.rel (0) target = $region33
    $region32: #{tpu_custom_call.1} parent=1 // pred_region
      %525 = dma.done [#allocation4], 1280
    $region33: #{tpu_custom_call.1} parent=1 // pred_fallthru
      _
    %526 = vsyncpa [#allocation3], 1
    %527 = vsyncpa [#allocation6], 1
    %528 = vsyncpa [#allocation4], 1

</llo_original>
